<compile_context>
chip_gen: v6e
topology: v6e:2x2x1
jax: 0.10.0
libtpu: 0.0.40
codegen_flags: <defaults>
</compile_context>

<pallas_src>
import math
import zlib

import jax
import jax.numpy as jnp
from jax.experimental import pallas as pl
from jax.experimental.pallas import tpu as pltpu


# ------------------------------ helpers ----------------------------------- #
def _round_up(n, m):
    return ((n + m - 1) // m) * m


def _pad_plan(din, dout, tile_cap=512):
    """Padded sizes + tile sizes (lane-dense, VMEM-bounded for v5e/v6e/v7x)."""
    def plan(d):
        if d <= tile_cap:
            dp = _round_up(d, 128)
            return dp, dp
        return _round_up(d, tile_cap), tile_cap
    din_p, tk = plan(din)
    dout_p, tn = plan(dout)
    return din_p, dout_p, tk, tn


# --------------------------- grouped Pallas kernel ------------------------- #
def grouped_linear(idx, x_packed, w_stack, b_stack, *, tb, tk, tn,
                   out_dtype=None):
    """One kernel for many (x, path) pairs.

    idx      : (G,) int32    -- weight index per group (scalar-prefetched).
    x_packed : (G*tb, Din_p) -- per-group rows packed along the sublane axis.
    w_stack  : (P, Din_p, Dout_p)
    b_stack  : (P, 1, Dout_p)
    returns  : (G*tb, Dout_p)
    """
    G = idx.shape[0]
    gtb, din_p = x_packed.shape
    P, din_p2, dout_p = w_stack.shape
    assert din_p == din_p2 and gtb == G * tb
    assert tb % 8 == 0 and din_p % tk == 0 and dout_p % tn == 0
    kt = din_p // tk
    nt = dout_p // tn
    out_dtype = out_dtype or x_packed.dtype

    def kernel(idx_ref, x_ref, w_ref, b_ref, o_ref, acc_ref):
        k = pl.program_id(2)

        @pl.when(k == 0)
        def _init():
            acc_ref[...] = jnp.zeros_like(acc_ref)

        acc_ref[...] += jnp.dot(x_ref[...], w_ref[0],
                                preferred_element_type=jnp.float32)

        @pl.when(k == pl.num_programs(2) - 1)
        def _store():
            # Bias add folded into the final writeback, done in f32.
            o_ref[...] = (acc_ref[...]
                          + b_ref[0].astype(jnp.float32)).astype(o_ref.dtype)

    flops = 2 * gtb * din_p * dout_p
    bytes_accessed = (x_packed.size * x_packed.dtype.itemsize * nt
                      + G * din_p * dout_p * w_stack.dtype.itemsize
                      + G * dout_p * b_stack.dtype.itemsize
                      + gtb * dout_p * jnp.dtype(out_dtype).itemsize)

    return pl.pallas_call(
        kernel,
        out_shape=jax.ShapeDtypeStruct((gtb, dout_p), out_dtype),
        grid_spec=pltpu.PrefetchScalarGridSpec(
            num_scalar_prefetch=1,
            grid=(G, nt, kt),                       # reduction axis last
            in_specs=[
                # x: rows of group g, K-tile k
                pl.BlockSpec((tb, tk), lambda g, n, k, idx_ref: (g, k)),
                # W: path-indexed slice, K/N tiles
                pl.BlockSpec((1, tk, tn),
                             lambda g, n, k, idx_ref: (idx_ref[g], k, n)),
                # b: path-indexed slice, N tile
                pl.BlockSpec((1, 1, tn),
                             lambda g, n, k, idx_ref: (idx_ref[g], 0, n)),
            ],
            out_specs=pl.BlockSpec((tb, tn), lambda g, n, k, idx_ref: (g, n)),
            scratch_shapes=[pltpu.VMEM((tb, tn), jnp.float32)],
        ),
        compiler_params=pltpu.CompilerParams(
            dimension_semantics=("parallel", "parallel", "arbitrary"),
            vmem_limit_bytes=32 * 1024 * 1024,
        ),
        cost_estimate=pl.CostEstimate(flops=flops, transcendentals=0,
                                      bytes_accessed=bytes_accessed),
    )(idx, x_packed, w_stack, b_stack)


# --------------------------- per-path sub-module --------------------------- #
class PallasLinear:
    """Per-path parameters (deterministic init, matches nn.Linear's U-bound)."""

    def __init__(self, key, in_features, out_features, dtype=jnp.float32):
        kw, kb = jax.random.split(key)
        bound = 1.0 / math.sqrt(in_features)
        # Stored pre-transposed: (in_features, out_features).
        self.w = jax.random.uniform(kw, (in_features, out_features), dtype,
                                    -bound, bound)
        self.b = jax.random.uniform(kb, (out_features,), dtype, -bound, bound)
        self.in_features = in_features
        self.out_features = out_features


# ------------------------------ ModuleDict --------------------------------- #
class ModuleDict:
    """JAX equivalent of json2vec_v2.moduledict.

    Lazily creates one sub-module per path key on first access and caches it.
    forward(x, path) dispatches through the grouped Pallas kernel; the fast
    path forward_batch(xs, paths) amortizes one pallas_call over many paths.
    """

    def __init__(self, module_cls, *args, **kwargs):
        self._path_dict = {}        # path -> module (params)
        self._path_index = {}       # path -> row in the stacked weight array
        self._module = module_cls
        self._args = args
        self._kwargs = kwargs
        self._base_key = jax.random.PRNGKey(0)
        self._stack_cache = None    # invalidated when a new path is created

    def _newmodule(self, key):
        # Deterministic per-path seed (stable across runs, unlike hash()).
        path_seed = zlib.crc32(key.encode("utf-8")) & 0x7FFFFFFF
        module_key = jax.random.fold_in(self._base_key, path_seed)
        module = self._module(module_key, *self._args, **self._kwargs)
        self._path_index[key] = len(self._path_dict)
        self._path_dict[key] = module
        self._stack_cache = None
        return module

    def __getitem__(self, key):
        result = self._path_dict.get(key)
        if result is None:
            result = self._newmodule(key)
        return result

    def _stacked(self):
        if self._stack_cache is None:
            mods = [m for _, m in sorted(
                self._path_dict.items(),
                key=lambda kv: self._path_index[kv[0]])]
            din, dout = mods[0].w.shape
            din_p, dout_p, tk, tn = _pad_plan(din, dout)
            w_pad = [jnp.pad(m.w, ((0, din_p - din), (0, dout_p - dout)))
                     for m in mods]
            b_pad = [jnp.pad(m.b, (0, dout_p - dout)).reshape(1, dout_p)
                     for m in mods]
            self._stack_cache = (jnp.stack(w_pad), jnp.stack(b_pad),
                                 (din, dout, din_p, dout_p, tk, tn))
        return self._stack_cache

    def forward(self, x, path):
        return self.forward_batch([x], [path])[0]

    def forward_batch(self, xs, paths):
        """Dispatch many (x, path) pairs in ONE pallas_call (all same batch)."""
        assert len(xs) == len(paths) and len(xs) > 0
        for p in paths:                       # lazy per-path creation / cache
            _ = self[p]
        w_stack, b_stack, (din, dout, din_p, dout_p, tk, tn) = self._stacked()

        B, din_x = xs[0].shape
        assert din_x == din
        out_dtype = xs[0].dtype
        compute_dtype = w_stack.dtype
        tb = max(8, _round_up(B, 8))          # sublane-aligned rows per group

        padded = [jnp.pad(x.astype(compute_dtype),
                          ((0, tb - B), (0, din_p - din))) for x in xs]
        x_packed = padded[0] if len(padded) == 1 else jnp.concatenate(padded, 0)
        idx = jnp.asarray([self._path_index[p] for p in paths],
                          dtype=jnp.int32)

        out = grouped_linear(idx, x_packed, w_stack, b_stack,
                             tb=tb, tk=tk, tn=tn, out_dtype=out_dtype)
        return [out[g * tb: g * tb + B, :dout] for g in range(len(paths))]


# TODO(synk): CUDAableModule.cuda()/.cpu() device-transfer plumbing has no
# Pallas equivalent (JAX arrays are placed by the runtime); omitted.


if __name__ == "__main__":
    batch, in_features, out_features = 8, 32, 32

    md = ModuleDict(PallasLinear, in_features, out_features)

    key = jax.random.PRNGKey(0)
    keys = jax.random.split(key, 4)
    xs = [jax.random.normal(k, (batch, in_features), dtype=jnp.float32)
          for k in keys]

    # --- original moduledict semantics: per-call dispatch, lazy create, cache
    y1 = md.forward(xs[0], "root.item.value")
    y2 = md.forward(xs[0], "root.other.value")
    y3 = md.forward(xs[0], "root.item.value")   # cached path -> same params
    y1, y2, y3 = jax.block_until_ready((y1, y2, y3))

    assert y1.shape == (batch, out_features)
    assert jnp.allclose(y1, y3)
    assert not jnp.allclose(y1, y2)

    mod = md["root.item.value"]
    y_ref = xs[0] @ mod.w + mod.b
    assert jnp.allclose(y1, y_ref, atol=1e-5, rtol=1e-5)

    # --- batched fast path: 4 (x, path) pairs in a single pallas_call
    paths = ["root.item.value", "root.other.value", "root.a", "root.b"]
    ys = jax.block_until_ready(md.forward_batch(xs, paths))
    for x_i, p_i, y_i in zip(xs, paths, ys):
        m = md[p_i]
        ref = x_i @ m.w + m.b
        assert jnp.allclose(y_i, ref, atol=1e-5, rtol=1e-5)

    # --- bf16 parameter storage (v6e/v7x MXU-peak path), f32 accumulate
    md16 = ModuleDict(PallasLinear, in_features, out_features,
                      dtype=jnp.bfloat16)
    y16 = jax.block_until_ready(md16.forward_batch(xs, paths))
    for x_i, p_i, y_i in zip(xs, paths, y16):
        m = md16[p_i]
        ref = (x_i.astype(jnp.float32) @ m.w.astype(jnp.float32)
               + m.b.astype(jnp.float32))
        assert jnp.allclose(y_i, ref, atol=5e-2, rtol=5e-2)

    print("KERNEL_OK")
</pallas_src>

<mosaic_0001>
module attributes {stable_mosaic.version = 11 : i64} {
  func.func @kernel(%arg0: i32, %arg1: i32, %arg2: i32, %arg3: memref<1xi32, #tpu.memory_space<smem>>, %arg4: memref<8x128xf32, #tpu.memory_space<vmem>>, %arg5: memref<1x128x128xf32, #tpu.memory_space<vmem>>, %arg6: memref<1x1x128xf32, #tpu.memory_space<vmem>>, %arg7: memref<8x128xf32, #tpu.memory_space<vmem>>, %arg8: memref<8x128xf32, #tpu.memory_space<vmem>>) attributes {dimension_semantics = [#tpu.dimension_semantics<parallel>, #tpu.dimension_semantics<parallel>, #tpu.dimension_semantics<arbitrary>], iteration_bounds = array<i64: 1, 1, 1>, scalar_prefetch = 1 : i64, scratch_operands = 1 : i64, tpu.core_type = #tpu.core_type<tc>, window_params = [{transform_indices = @transform_0, window_bounds = array<i64: 8, 128>}, {transform_indices = @transform_1, window_bounds = array<i64: 1, 128, 128>}, {transform_indices = @transform_2, window_bounds = array<i64: 1, 1, 128>}, {transform_indices = @transform_3, window_bounds = array<i64: 8, 128>}]} {
    %c0_i32 = arith.constant 0 : i32
    %0 = arith.cmpi eq, %arg2, %c0_i32 : i32
    %1 = arith.extui %0 : i1 to i32
    %c0_i32_0 = arith.constant 0 : i32
    %2 = arith.cmpi ne, %1, %c0_i32_0 : i32
    scf.if %2 {
      %cst_11 = arith.constant 0.000000e+00 : f32
      %13 = vector.broadcast %cst_11 : f32 to vector<8x128xf32>
      %c0_12 = arith.constant 0 : index
      %c0_13 = arith.constant 0 : index
      %14 = vector.load %arg8[%c0_12, %c0_13] : memref<8x128xf32, #tpu.memory_space<vmem>>, vector<8x128xf32>
      tpu.vector_store %arg8[%c0_12, %c0_13], %13 {strides = array<i32>} : memref<8x128xf32, #tpu.memory_space<vmem>>, vector<8x128xf32>,
    } else {
    }
    %c0 = arith.constant 0 : index
    %c0_1 = arith.constant 0 : index
    %3 = vector.load %arg8[%c0, %c0_1] : memref<8x128xf32, #tpu.memory_space<vmem>>, vector<8x128xf32>
    %c0_2 = arith.constant 0 : index
    %c0_3 = arith.constant 0 : index
    %4 = vector.load %arg4[%c0_2, %c0_3] : memref<8x128xf32, #tpu.memory_space<vmem>>, vector<8x128xf32>
    %c0_4 = arith.constant 0 : index
    %c0_5 = arith.constant 0 : index
    %c0_6 = arith.constant 0 : index
    %5 = vector.load %arg5[%c0_4, %c0_5, %c0_6] : memref<1x128x128xf32, #tpu.memory_space<vmem>>, vector<1x128x128xf32>
    %6 = vector.shape_cast %5 : vector<1x128x128xf32> to vector<128x128xf32>
    %cst = arith.constant dense<0.000000e+00> : vector<8x128xf32>
    %7 = tpu.matmul %4, %6, %cst {dimension_numbers = #tpu.dot_dimension_numbers<[1], [0], [0], [1], [0, 0, 1, 1], [], []>} : vector<8x128xf32>, vector<128x128xf32>, vector<8x128xf32> -> vector<8x128xf32>
    %8 = arith.addf %3, %7 : vector<8x128xf32>
    %c0_7 = arith.constant 0 : index
    %c0_8 = arith.constant 0 : index
    %9 = vector.load %arg8[%c0_7, %c0_8] : memref<8x128xf32, #tpu.memory_space<vmem>>, vector<8x128xf32>
    tpu.vector_store %arg8[%c0_7, %c0_8], %8 {strides = array<i32>} : memref<8x128xf32, #tpu.memory_space<vmem>>, vector<8x128xf32>,
    %c0_i32_9 = arith.constant 0 : i32
    %10 = arith.cmpi eq, %arg2, %c0_i32_9 : i32
    %11 = arith.extui %10 : i1 to i32
    %c0_i32_10 = arith.constant 0 : i32
    %12 = arith.cmpi ne, %11, %c0_i32_10 : i32
    scf.if %12 {
      %c0_11 = arith.constant 0 : index
      %c0_12 = arith.constant 0 : index
      %13 = vector.load %arg8[%c0_11, %c0_12] : memref<8x128xf32, #tpu.memory_space<vmem>>, vector<8x128xf32>
      %c0_13 = arith.constant 0 : index
      %c0_14 = arith.constant 0 : index
      %c0_15 = arith.constant 0 : index
      %14 = vector.load %arg6[%c0_13, %c0_14, %c0_15] : memref<1x1x128xf32, #tpu.memory_space<vmem>>, vector<1x1x128xf32>
      %15 = vector.shape_cast %14 : vector<1x1x128xf32> to vector<1x128xf32>
      %16 = vector.broadcast %15 : vector<1x128xf32> to vector<8x128xf32>
      %17 = arith.addf %13, %16 : vector<8x128xf32>
      %c0_16 = arith.constant 0 : index
      %c0_17 = arith.constant 0 : index
      %18 = vector.load %arg7[%c0_16, %c0_17] : memref<8x128xf32, #tpu.memory_space<vmem>>, vector<8x128xf32>
      tpu.vector_store %arg7[%c0_16, %c0_17], %17 {strides = array<i32>} : memref<8x128xf32, #tpu.memory_space<vmem>>, vector<8x128xf32>,
    } else {
    }
    return
  }
  func.func @transform_0(%arg0: i32, %arg1: i32, %arg2: i32, %arg3: memref<1xi32, #tpu.memory_space<smem>>) -> (i32, i32) {
    %c0_i32 = arith.constant 0 : i32
    return %arg0, %arg2 : i32, i32
  }
  func.func @transform_1(%arg0: i32, %arg1: i32, %arg2: i32, %arg3: memref<1xi32, #tpu.memory_space<smem>>) -> (i32, i32, i32) {
    %0 = arith.index_cast %arg0 : i32 to index
    %1 = memref.load %arg3[%0] : memref<1xi32, #tpu.memory_space<smem>>
    %c0_i32 = arith.constant 0 : i32
    return %1, %arg2, %arg1 : i32, i32, i32
  }
  func.func @transform_2(%arg0: i32, %arg1: i32, %arg2: i32, %arg3: memref<1xi32, #tpu.memory_space<smem>>) -> (i32, i32, i32) {
    %0 = arith.index_cast %arg0 : i32 to index
    %1 = memref.load %arg3[%0] : memref<1xi32, #tpu.memory_space<smem>>
    %c0_i32 = arith.constant 0 : i32
    %c0_i32_0 = arith.constant 0 : i32
    return %1, %c0_i32, %arg1 : i32, i32, i32
  }
  func.func @transform_3(%arg0: i32, %arg1: i32, %arg2: i32, %arg3: memref<1xi32, #tpu.memory_space<smem>>) -> (i32, i32) {
    %c0_i32 = arith.constant 0 : i32
    return %arg0, %arg1 : i32, i32
  }
}

</mosaic_0001>

<llo_original>
// kernel: tpu_custom_call.1
$region0: #{tpu_custom_call.1}
  #allocation0 [shape = 'u32[]', space=smem, size = 0x4, offset = 0x4, fixed_abs, tag = 'smem constant byte address 0x4 - core index']
  #allocation1 [shape = 'u32[144,128]{1,0:T(1,128)}', space=vmem, size = 0x12000, scoped, tag = 'internal scratch']
  #allocation2 [shape = 'f32[8,128]{1,0:T(8,128)}', space=vmem, size = 0x1000, scoped, tag = 'scratch operand']
  #allocation3 [shape = 's32[1]{0}', space=sflag, size = 0x4, scoped, tag = 'scoped memory for tpu_custom_call.1']
  #allocation4 [shape = 's32[1]{0:T(128)S(6)}', space=smem, size = 0x200, scoped, tag = 'prefetched SMEM operand 0']
  %s0 = inlined_call_operand.<no memory space> [shape: s32[1], index: 0, kind: input, shape index: {}]
  %s1 = inlined_call_operand.hbm [shape: f32[8,128], index: 1, kind: input, shape index: {}]
  %s2 = inlined_call_operand.hbm [shape: f32[1,128,128], index: 2, kind: input, shape index: {}]
  %s3 = inlined_call_operand.vmem [shape: f32[1,1,128], index: 3, kind: input, shape index: {}]
  %s4 = inlined_call_operand.hbm [shape: f32[8,128], index: 4, kind: output, shape index: {}]
  %s5 = sld [smem:[#allocation0]]
  $region38: #{tpu_custom_call.1} parent=0
    _
  %s7 = ssub.s32 1, %s5
  %s8 = scalar_select 0, %s7, %s5
  %9 = sst [smem:[#allocation4]] %s0
  $region1: #{tpu_custom_call.1} parent=0
    #allocation5 [shape = 'u8[4096]{0}', space=vmem, size = 0x1000, scoped, tag = 'input window, operand 1, single buffered']
    #allocation6 [shape = 's32[1]{0}', space=sflag, size = 0x4, scoped, tag = 'scoped memory for tpu_custom_call.1']
    #allocation7 [shape = 's32[1]{0}', space=sflag, size = 0x4, scoped, tag = 'scoped memory for tpu_custom_call.1']
    #allocation8 [shape = 'u8[65536]{0}', space=vmem, size = 0x10000, scoped, tag = 'input window, operand 2, single buffered']
    #allocation9 [shape = 's32[1]{0}', space=sflag, size = 0x4, scoped, tag = 'scoped memory for tpu_custom_call.1']
    #allocation10 [shape = 'u8[4096]{0}', space=vmem, size = 0x1000, scoped, tag = 'output window, operand 0, single buffered']
    %10 = vsyncpa [#allocation6], 0
    %11 = vsyncpa [#allocation9], 0
    %12 = vsyncpa [#allocation7], 0
    // Predicated region
    $region2: #{tpu_custom_call.1} parent=1 // pred_check
      _
    $region3: #{tpu_custom_call.1} parent=1 // pred_check_branch
      %14 = sbr.rel (0) target = $region5
    $region4: #{tpu_custom_call.1} parent=1 // pred_region
      %s16 = ssub.s32 128, 128
      %17 = vsyncadd [#allocation6], %s16
      %s19 = sshll.u32 [#allocation5], 4
      %s20 = int_to_ptr.vmem [resolvable:$true] %s19
      %22 = dma.hbm_to_vmem [thread:$0]  %s1, 128, %s20, [#allocation6]
    $region5: #{tpu_custom_call.1} parent=1 // pred_fallthru
      _
    // Predicated region
    $region6: #{tpu_custom_call.1} parent=1 // pred_check
      _
    $region7: #{tpu_custom_call.1} parent=1 // pred_check_branch
      %24 = sbr.rel (0) target = $region9
    $region8: #{tpu_custom_call.1} parent=1 // pred_region
      %s25 = sld [smem:[#allocation4]]
      %s27 = ssub.s32 2048, 2048
      %28 = vsyncadd [#allocation9], %s27
      %s29 = smul.addr %s25, 16
      %s30 = smul.addr %s29, 128
      %s31 = scalar_lea.hbm %s2, %s30
      %s32 = sshll.u32 [#allocation8], 4
      %s33 = int_to_ptr.vmem [resolvable:$true] %s32
      %38 = dma.hbm_to_vmem [thread:$0]  %s31, 2048, %s33, [#allocation9], 128, 128, 8
    $region9: #{tpu_custom_call.1} parent=1 // pred_fallthru
      _
    // Predicated region
    $region10: #{tpu_custom_call.1} parent=1 // pred_check
      _
    $region11: #{tpu_custom_call.1} parent=1 // pred_check_branch
      %40 = sbr.rel (0) target = $region13
    $region12: #{tpu_custom_call.1} parent=1 // pred_region
      %s41 = sld [smem:[#allocation4]]
      %p42 = scmp.lt.s32.totalorder %s41, 0
      %s43 = scalar_select %p42, %s41, 0
      %s44 = scalar_lea.vmem %s3, %s43
      %s45 = sld [smem:[#allocation4]]
    $region13: #{tpu_custom_call.1} parent=1 // pred_fallthru
      _
    // Predicated region
    $region14: #{tpu_custom_call.1} parent=1 // pred_check
      _
    $region15: #{tpu_custom_call.1} parent=1 // pred_check_branch
      %47 = sbr.rel (0) target = $region17
    $region16: #{tpu_custom_call.1} parent=1 // pred_region
      %48 = dma.done [#allocation6], 128
    $region17: #{tpu_custom_call.1} parent=1 // pred_fallthru
      _
    // Predicated region
    $region18: #{tpu_custom_call.1} parent=1 // pred_check
      _
    $region19: #{tpu_custom_call.1} parent=1 // pred_check_branch
      %50 = sbr.rel (0) target = $region21
    $region20: #{tpu_custom_call.1} parent=1 // pred_region
      %51 = dma.done [#allocation9], 2048
    $region21: #{tpu_custom_call.1} parent=1 // pred_fallthru
      _
    %s52 = sld [smem:[#allocation4]]
    %p53 = scmp.lt.s32.totalorder %s52, 0
    %s54 = scalar_select %p53, %s52, 0
    %s55 = scalar_lea.vmem %s3, %s54
    %s56 = sld [smem:[#allocation4]]
    %s57 = sld [smem:[#allocation4]]
    %p58 = scmp.lt.s32.totalorder %s57, 0
    %s59 = scalar_select %p58, %s57, 0
    %s60 = scalar_lea.vmem %s3, %s59
    %s61 = sld [smem:[#allocation4]]
    %p62 = scmp.eq.s32.totalorder 0, 0
    // Predicated region
    $region22: #{tpu_custom_call.1} parent=1 // pred_check
      %p63 = pneg %p62
    $region23: #{tpu_custom_call.1} parent=1 // pred_check_branch
      %65 = sbr.rel (%p63) target = $region25
    $region24: #{tpu_custom_call.1} parent=1 // pred_region
      %66 = vst [vmem:[#allocation2] sm:$0xff] 0.0
    $region25: #{tpu_custom_call.1} parent=1 // pred_fallthru
      _
    %v67 = vld [vmem:[#allocation2] sm:$0xff]
    %v68 = vld [vmem:[#allocation5] sm:$0xff]
    %v69 = vld [vmem:[#allocation8] sm:$0xff]
    %v70 = vld [vmem:[#allocation8 + $0x8] sm:$0xff]
    %v71 = vld [vmem:[#allocation8 + $0x10] sm:$0xff]
    %v72 = vld [vmem:[#allocation8 + $0x18] sm:$0xff]
    %v73 = vld [vmem:[#allocation8 + $0x20] sm:$0xff]
    %v74 = vld [vmem:[#allocation8 + $0x28] sm:$0xff]
    %v75 = vld [vmem:[#allocation8 + $0x30] sm:$0xff]
    %v76 = vld [vmem:[#allocation8 + $0x38] sm:$0xff]
    %v77 = vld [vmem:[#allocation8 + $0x40] sm:$0xff]
    %v78 = vld [vmem:[#allocation8 + $0x48] sm:$0xff]
    %v79 = vld [vmem:[#allocation8 + $0x50] sm:$0xff]
    %v80 = vld [vmem:[#allocation8 + $0x58] sm:$0xff]
    %v81 = vld [vmem:[#allocation8 + $0x60] sm:$0xff]
    %v82 = vld [vmem:[#allocation8 + $0x68] sm:$0xff]
    %v83 = vld [vmem:[#allocation8 + $0x70] sm:$0xff]
    %v84 = vld [vmem:[#allocation8 + $0x78] sm:$0xff]
    %85 = vmatprep.subr.mxu0 0.0
    %86 = vmatpush1.msra.mxu0 %v84
    %87 = vmatprep.subr.mxu0 0.0
    %88 = vmatpush1.msra.mxu0 %v83
    %89 = vmatprep.subr.mxu0 0.0
    %90 = vmatpush1.msra.mxu0 %v82
    %91 = vmatprep.subr.mxu0 0.0
    %92 = vmatpush1.msra.mxu0 %v81
    %93 = vmatprep.subr.mxu0 0.0
    %94 = vmatpush1.msra.mxu0 %v80
    %95 = vmatprep.subr.mxu0 0.0
    %96 = vmatpush1.msra.mxu0 %v79
    %97 = vmatprep.subr.mxu0 0.0
    %98 = vmatpush1.msra.mxu0 %v78
    %99 = vmatprep.subr.mxu0 0.0
    %100 = vmatpush1.msra.mxu0 %v77
    %101 = vmatprep.subr.mxu0 0.0
    %102 = vmatpush1.msra.mxu0 %v76
    %103 = vmatprep.subr.mxu0 0.0
    %104 = vmatpush1.msra.mxu0 %v75
    %105 = vmatprep.subr.mxu0 0.0
    %106 = vmatpush1.msra.mxu0 %v74
    %107 = vmatprep.subr.mxu0 0.0
    %108 = vmatpush1.msra.mxu0 %v73
    %109 = vmatprep.subr.mxu0 0.0
    %110 = vmatpush1.msra.mxu0 %v72
    %111 = vmatprep.subr.mxu0 0.0
    %112 = vmatpush1.msra.mxu0 %v71
    %113 = vmatprep.subr.mxu0 0.0
    %114 = vmatpush1.msra.mxu0 %v70
    %115 = vmatprep.subr.mxu0 0.0
    %116 = vmatpush1.msra.mxu0 %v69
    %117 = vmatprep.subr.mxu0 0.0
    %118 = vmatpush2.msra.mxu0 0.0
    %119 = vmatprep.subr.mxu0 0.0
    %120 = vmatpush2.msra.mxu0 0.0
    %121 = vmatprep.subr.mxu0 0.0
    %122 = vmatpush2.msra.mxu0 0.0
    %123 = vmatprep.subr.mxu0 0.0
    %124 = vmatpush2.msra.mxu0 0.0
    %125 = vmatprep.subr.mxu0 0.0
    %126 = vmatpush2.msra.mxu0 0.0
    %127 = vmatprep.subr.mxu0 0.0
    %128 = vmatpush2.msra.mxu0 0.0
    %129 = vmatprep.subr.mxu0 0.0
    %130 = vmatpush2.msra.mxu0 0.0
    %131 = vmatprep.subr.mxu0 0.0
    %132 = vmatpush2.msra.mxu0 0.0
    %133 = vmatprep.subr.mxu0 0.0
    %134 = vmatpush2.msra.mxu0 0.0
    %135 = vmatprep.subr.mxu0 0.0
    %136 = vmatpush2.msra.mxu0 0.0
    %137 = vmatprep.subr.mxu0 0.0
    %138 = vmatpush2.msra.mxu0 0.0
    %139 = vmatprep.subr.mxu0 0.0
    %140 = vmatpush2.msra.mxu0 0.0
    %141 = vmatprep.subr.mxu0 0.0
    %142 = vmatpush2.msra.mxu0 0.0
    %143 = vmatprep.subr.mxu0 0.0
    %144 = vmatpush2.msra.mxu0 0.0
    %145 = vmatprep.subr.mxu0 0.0
    %146 = vmatpush2.msra.mxu0 0.0
    %147 = vmatprep.subr.mxu0 0.0
    %148 = vmatpush2.msra.mxu0 0.0
    %149 = vmatprep.mubr.f32.mxu0 0.0
    %150 = vmatmul.mubr.f32.gmra.mxu0 %v68
    %v151 = vpop.f32.mrf.mxu0
    %v152 = vadd.f32 0.0, %v151
    %v153 = vpop.f32.mrf.mxu0
    %154 = vdwg.mxu0
    %v155 = vadd.f32 %v67, %v152
    %156 = vst [vmem:[#allocation2] sm:$0xff] %v155
    // Predicated region
    $region26: #{tpu_custom_call.1} parent=1 // pred_check
      %p157 = pneg %p62
    $region27: #{tpu_custom_call.1} parent=1 // pred_check_branch
      %159 = sbr.rel (%p157) target = $region29
    $region28: #{tpu_custom_call.1} parent=1 // pred_region
      %v160 = vld [vmem:[#allocation2] sm:$0xff]
      %v161 = vld [vmem:[%s60] sm:$0x1]
      %v163 = vlaneseq
      %v164 = vshrl.u32 %v163, 7
      %v165 = vsub.s32 0, %v164
      %v166 = vrot.slane %v161, %v165
      %v168 = vadd.f32 %v160, %v166
      %169 = vst [vmem:[#allocation10] sm:$0xff] %v168
    $region29: #{tpu_custom_call.1} parent=1 // pred_fallthru
      _
    // Predicated region
    $region30: #{tpu_custom_call.1} parent=1 // pred_check
      _
    $region31: #{tpu_custom_call.1} parent=1 // pred_check_branch
      %171 = sbr.rel (0) target = $region33
    $region32: #{tpu_custom_call.1} parent=1 // pred_region
      %s173 = ssub.s32 128, 128
      %174 = vsyncadd [#allocation7], %s173
      %s176 = sshll.u32 [#allocation10], 4
      %s177 = int_to_ptr.vmem [resolvable:$true] %s176
      %179 = dma.vmem_to_hbm [thread:$0]  %s177, 128, %s4, [#allocation7]
    $region33: #{tpu_custom_call.1} parent=1 // pred_fallthru
      _
    // Predicated region
    $region34: #{tpu_custom_call.1} parent=1 // pred_check
      _
    $region35: #{tpu_custom_call.1} parent=1 // pred_check_branch
      %181 = sbr.rel (0) target = $region37
    $region36: #{tpu_custom_call.1} parent=1 // pred_region
      %182 = dma.done [#allocation7], 128
    $region37: #{tpu_custom_call.1} parent=1 // pred_fallthru
      _
    %183 = vsyncpa [#allocation6], 1
    %184 = vsyncpa [#allocation9], 1
    %185 = vsyncpa [#allocation7], 1

</llo_original>
